<compile_context>
chip_gen: v5e
topology: v5e:2x2
jax: 0.10.0
libtpu: 0.0.40
codegen_flags: <defaults>
</compile_context>

<pallas_src>
import numpy as np

import jax
import jax.numpy as jnp
from jax.experimental import pallas as pl
from jax.experimental.pallas import tpu as pltpu

_LANE = 128
_TARGET_BLOCK_ELEMS = 256 * 1024   # ~1 MiB of f32 per block (safe on v7x 64 MiB VMEM)
_TN_CAP = 16384                    # max lanes per block (multiple of 128)


def _round_up(a, b):
    return (a + b - 1) // b * b


def _choose_tiles(B, N):
    """Pick lane-dense (TB, TN) tiles and the padded (Bp, Np) shape."""
    Np = _round_up(N, _LANE)
    TN = min(Np, _TN_CAP)
    Np = _round_up(Np, TN)
    rows_per_block = max(1, _TARGET_BLOCK_ELEMS // TN)
    if B <= max(rows_per_block, 8):
        TB, Bp = B, B                       # block covers the full batch axis
    else:
        TB = max(8, (rows_per_block // 8) * 8)
        Bp = _round_up(B, TB)
    return TB, TN, Bp, Np


def _make_hw_prng_kernel(P):
    """Kernel variant using the TPU hardware PRNG (real-TPU path)."""
    P = float(P)
    p_plus = P + 1e-6
    inv_p = 1.0 / P

    def kernel(seed_ref, c_ref, x_ref, o_ref):
        i = pl.program_id(0)
        j = pl.program_id(1)
        # Distinct stream per grid tile so tiled masks are not replayed.
        pltpu.prng_seed(seed_ref[0], i, j)

        xf = x_ref[...].astype(jnp.float32)
        denom = c_ref[...] * xf + p_plus            # (1-P)(N-1)p_act + P + 1e-6
        # retain_prob = P / denom; approx reciprocal runs on the EUP slot.
        retain_prob = P * pl.reciprocal(denom, approx=True)
        # 1 / clamp(retain_prob, 1e-6) without a per-element divide.
        scale = jnp.minimum(denom * inv_p, 1e6)

        bits = pltpu.bitcast(pltpu.prng_random_bits(xf.shape), jnp.uint32)
        # Uniform [0, 1) via the mantissa trick.
        u = pltpu.bitcast((bits >> 9) | jnp.uint32(0x3F800000), jnp.float32) - 1.0

        o_ref[...] = jnp.where(u < retain_prob, xf * scale, 0.0).astype(o_ref.dtype)

    return kernel


def _make_external_uniform_kernel(P):
    """Kernel variant taking precomputed uniforms (non-TPU / interpreter path)."""
    P = float(P)
    p_plus = P + 1e-6
    inv_p = 1.0 / P

    def kernel(c_ref, x_ref, u_ref, o_ref):
        xf = x_ref[...].astype(jnp.float32)
        denom = c_ref[...] * xf + p_plus
        retain_prob = P / denom
        scale = jnp.minimum(denom * inv_p, 1e6)
        o_ref[...] = jnp.where(u_ref[...] < retain_prob, xf * scale, 0.0).astype(o_ref.dtype)

    return kernel


def activation_dropout(x, base_retain_prob=0.5, seed=0, training=True):
    """Pallas implementation of ActivationDropout.forward."""
    if not training:
        return x

    shape = x.shape
    B = int(shape[0])
    N = int(np.prod(shape[1:]))
    P = float(base_retain_prob)

    x_flat = x.reshape(B, N)

    # One fused XLA row reduction; folded into a per-row constant so the
    # Pallas kernel is purely elementwise and can tile over both axes.
    act_sum = jnp.sum(x_flat.astype(jnp.float32), axis=1, keepdims=True) + 1e-8
    c_row = ((1.0 - P) * float(N - 1)) / act_sum                      # (B, 1) f32

    TB, TN, Bp, Np = _choose_tiles(B, N)
    grid = (Bp // TB, Np // TN)

    xp, cp = x_flat, c_row
    if (Bp, Np) != (B, N):
        # Pad to a lane-dense, evenly-tileable shape (avoids masked partial
        # stores); the padding is sliced off below.
        xp = jnp.pad(x_flat, ((0, Bp - B), (0, Np - N)))
        cp = jnp.pad(c_row, ((0, Bp - B), (0, 0)))

    c_spec = pl.BlockSpec((TB, 1), lambda i, j: (i, 0))
    xio_spec = pl.BlockSpec((TB, TN), lambda i, j: (i, j))
    out_shape = jax.ShapeDtypeStruct((Bp, Np), x.dtype)

    use_hw_prng = jax.default_backend() == "tpu"
    if use_hw_prng:
        kernel = _make_hw_prng_kernel(P)
        seed_arr = jnp.asarray([seed], dtype=jnp.int32)
        out_p = pl.pallas_call(
            kernel,
            grid=grid,
            in_specs=[
                pl.BlockSpec(memory_space=pltpu.MemorySpace.SMEM),   # seed
                c_spec,                                              # per-row const
                xio_spec,                                            # x
            ],
            out_specs=xio_spec,
            out_shape=out_shape,
            compiler_params=pltpu.CompilerParams(
                dimension_semantics=("parallel", "parallel"),
                vmem_limit_bytes=48 * 1024 * 1024,
            ),
        )(seed_arr, cp, xp)
    else:
        # Non-TPU backend: pltpu.prng_* cannot lower, feed uniforms instead.
        kernel = _make_external_uniform_kernel(P)
        u = jax.random.uniform(jax.random.PRNGKey(int(seed)), (Bp, Np),
                               dtype=jnp.float32)
        out_p = pl.pallas_call(
            kernel,
            grid=grid,
            in_specs=[c_spec, xio_spec, xio_spec],
            out_specs=xio_spec,
            out_shape=out_shape,
        )(cp, xp, u)

    if (Bp, Np) != (B, N):
        out_p = out_p[:B, :N]
    return out_p.reshape(shape)


if __name__ == "__main__":
    key = jax.random.PRNGKey(0)
    # Small NCHW input consistent with a conv-activation tensor.
    x = jax.random.uniform(key, (2, 4, 16, 16), dtype=jnp.float32)

    y = activation_dropout(x, base_retain_prob=0.5, seed=1234, training=True)
    y = jax.block_until_ready(y)

    # Shape/dtype preserved, values finite.
    assert y.shape == x.shape and y.dtype == x.dtype
    assert bool(jnp.all(jnp.isfinite(y)))

    # Deterministic part of the semantics: every kept (nonzero) element must
    # equal x / clamp(retain_prob, 1e-6); dropped elements are exactly 0.
    x_flat = x.reshape(2, -1).astype(jnp.float32)
    act_sum = x_flat.sum(axis=1, keepdims=True) + 1e-8
    p_act = x_flat / act_sum
    N = x_flat.shape[1]
    retain = 0.5 / ((1.0 - 0.5) * (N - 1) * p_act + 0.5 + 1e-6)
    expected_kept = x_flat / jnp.clip(retain, 1e-6, None)
    y_flat = y.reshape(2, -1)
    kept = y_flat != 0
    ok = jnp.where(kept,
                   jnp.abs(y_flat - expected_kept)
                   <= 1e-3 * jnp.abs(expected_kept) + 1e-5,
                   True)
    assert bool(jnp.all(ok))

    # Dropout actually happened (some kept, some dropped).
    frac_kept = float(jnp.mean(kept.astype(jnp.float32)))
    assert 0.05 < frac_kept < 0.995

    # Eval mode is identity.
    y_eval = activation_dropout(x, base_retain_prob=0.5, seed=1234, training=False)
    assert bool(jnp.all(y_eval == x))

    print("KERNEL_OK")
</pallas_src>

<mosaic_0001>
module attributes {stable_mosaic.version = 11 : i64} {
  func.func @kernel(%arg0: i32, %arg1: i32, %arg2: memref<2x1xf32, #tpu.memory_space<vmem>>, %arg3: memref<2x1024xf32, #tpu.memory_space<vmem>>, %arg4: memref<2x1024xf32, #tpu.memory_space<vmem>>, %arg5: memref<2x1024xf32, #tpu.memory_space<vmem>>) attributes {dimension_semantics = [#tpu.dimension_semantics<arbitrary>, #tpu.dimension_semantics<arbitrary>], iteration_bounds = array<i64: 1, 1>, scalar_prefetch = 0 : i64, scratch_operands = 0 : i64, tpu.core_type = #tpu.core_type<tc>, window_params = [{transform_indices = @transform_0, window_bounds = array<i64: 2, 1>}, {transform_indices = @transform_1, window_bounds = array<i64: 2, 1024>}, {transform_indices = @transform_2, window_bounds = array<i64: 2, 1024>}, {transform_indices = @transform_3, window_bounds = array<i64: 2, 1024>}]} {
    %c0 = arith.constant 0 : index
    %c0_0 = arith.constant 0 : index
    %0 = vector.load %arg3[%c0, %c0_0] : memref<2x1024xf32, #tpu.memory_space<vmem>>, vector<2x1024xf32>
    %c0_1 = arith.constant 0 : index
    %c0_2 = arith.constant 0 : index
    %1 = vector.load %arg2[%c0_1, %c0_2] : memref<2x1xf32, #tpu.memory_space<vmem>>, vector<2x1xf32>
    %2 = vector.broadcast %1 : vector<2x1xf32> to vector<2x1024xf32>
    %3 = arith.mulf %2, %0 : vector<2x1024xf32>
    %cst = arith.constant 5.000010e-01 : f32
    %4 = vector.broadcast %cst : f32 to vector<2x1024xf32>
    %5 = arith.addf %3, %4 : vector<2x1024xf32>
    %cst_3 = arith.constant 5.000000e-01 : f32
    %6 = vector.broadcast %cst_3 : f32 to vector<2x1024xf32>
    %7 = arith.divf %6, %5 : vector<2x1024xf32>
    %cst_4 = arith.constant 2.000000e+00 : f32
    %8 = vector.broadcast %cst_4 : f32 to vector<2x1024xf32>
    %9 = arith.mulf %5, %8 : vector<2x1024xf32>
    %cst_5 = arith.constant 1.000000e+06 : f32
    %10 = vector.broadcast %cst_5 : f32 to vector<2x1024xf32>
    %11 = arith.minimumf %9, %10 : vector<2x1024xf32>
    %c0_6 = arith.constant 0 : index
    %c0_7 = arith.constant 0 : index
    %12 = vector.load %arg4[%c0_6, %c0_7] : memref<2x1024xf32, #tpu.memory_space<vmem>>, vector<2x1024xf32>
    %13 = arith.cmpf olt, %12, %7 : vector<2x1024xf32>
    %14 = arith.mulf %0, %11 : vector<2x1024xf32>
    %cst_8 = arith.constant 0.000000e+00 : f32
    %15 = vector.broadcast %cst_8 : f32 to vector<2x1024xf32>
    %16 = arith.select %13, %14, %15 : vector<2x1024xi1>, vector<2x1024xf32>
    %c0_9 = arith.constant 0 : index
    %c0_10 = arith.constant 0 : index
    %17 = vector.load %arg5[%c0_9, %c0_10] : memref<2x1024xf32, #tpu.memory_space<vmem>>, vector<2x1024xf32>
    tpu.vector_store %arg5[%c0_9, %c0_10], %16 {strides = array<i32>} : memref<2x1024xf32, #tpu.memory_space<vmem>>, vector<2x1024xf32>,
    return
  }
  func.func @transform_0(%arg0: i32, %arg1: i32) -> (i32, i32) {
    %c0_i32 = arith.constant 0 : i32
    %c0_i32_0 = arith.constant 0 : i32
    return %arg0, %c0_i32 : i32, i32
  }
  func.func @transform_1(%arg0: i32, %arg1: i32) -> (i32, i32) {
    %c0_i32 = arith.constant 0 : i32
    return %arg0, %arg1 : i32, i32
  }
  func.func @transform_2(%arg0: i32, %arg1: i32) -> (i32, i32) {
    %c0_i32 = arith.constant 0 : i32
    return %arg0, %arg1 : i32, i32
  }
  func.func @transform_3(%arg0: i32, %arg1: i32) -> (i32, i32) {
    %c0_i32 = arith.constant 0 : i32
    return %arg0, %arg1 : i32, i32
  }
}

</mosaic_0001>

<llo_original>
// kernel: tpu_custom_call.1
$region0: #{tpu_custom_call.1}
  #allocation0 [shape = 'u32[]', space=smem, size = 0x4, offset = 0x4, fixed_abs, tag = 'smem constant byte address 0x4 - core index']
  #allocation1 [shape = 'u32[72,128]{1,0:T(1,128)}', space=vmem, size = 0x9000, scoped, tag = 'internal scratch']
  %s0 = inlined_call_operand.vmem [shape: f32[2,1], index: 0, kind: input, shape index: {}]
  %s1 = inlined_call_operand.hbm [shape: f32[2,1024], index: 1, kind: input, shape index: {}]
  %s2 = inlined_call_operand.hbm [shape: f32[2,1024], index: 2, kind: input, shape index: {}]
  %s3 = inlined_call_operand.hbm [shape: f32[2,1024], index: 3, kind: output, shape index: {}]
  %s4 = sld [smem:[#allocation0]]
  $region30: #{tpu_custom_call.1} parent=0
    _
  %s6 = ssub.s32 1, %s4
  %s7 = scalar_select 0, %s6, %s4
  $region1: #{tpu_custom_call.1} parent=0
    #allocation2 [shape = 'u8[8192]{0}', space=vmem, size = 0x2000, scoped, tag = 'input window, operand 1, single buffered']
    #allocation3 [shape = 's32[1]{0}', space=sflag, size = 0x4, scoped, tag = 'scoped memory for tpu_custom_call.1']
    #allocation4 [shape = 's32[1]{0}', space=sflag, size = 0x4, scoped, tag = 'scoped memory for tpu_custom_call.1']
    #allocation5 [shape = 'u8[8192]{0}', space=vmem, size = 0x2000, scoped, tag = 'input window, operand 2, single buffered']
    #allocation6 [shape = 's32[1]{0}', space=sflag, size = 0x4, scoped, tag = 'scoped memory for tpu_custom_call.1']
    #allocation7 [shape = 'u8[8192]{0}', space=vmem, size = 0x2000, scoped, tag = 'output window, operand 0, single buffered']
    %8 = vsyncpa [#allocation3], 0
    %9 = vsyncpa [#allocation6], 0
    %10 = vsyncpa [#allocation4], 0
    // Predicated region
    $region2: #{tpu_custom_call.1} parent=1 // pred_check
      _
    $region3: #{tpu_custom_call.1} parent=1 // pred_check_branch
      %12 = sbr.rel (0) target = $region5
    $region4: #{tpu_custom_call.1} parent=1 // pred_region
      _
    $region5: #{tpu_custom_call.1} parent=1 // pred_fallthru
      _
    // Predicated region
    $region6: #{tpu_custom_call.1} parent=1 // pred_check
      _
    $region7: #{tpu_custom_call.1} parent=1 // pred_check_branch
      %14 = sbr.rel (0) target = $region9
    $region8: #{tpu_custom_call.1} parent=1 // pred_region
      %16 = vsyncadd [#allocation3], 0
      %s18 = sshll.u32 %s1, 4
      %s19 = int_to_ptr.hbm [resolvable:$true] %s18
      %s20 = sshll.u32 [#allocation2], 4
      %s21 = int_to_ptr.vmem [resolvable:$true] %s20
      %23 = dma.hbm_to_vmem [thread:$0]  %s19, 256, %s21, [#allocation3]
    $region9: #{tpu_custom_call.1} parent=1 // pred_fallthru
      _
    // Predicated region
    $region10: #{tpu_custom_call.1} parent=1 // pred_check
      _
    $region11: #{tpu_custom_call.1} parent=1 // pred_check_branch
      %25 = sbr.rel (0) target = $region13
    $region12: #{tpu_custom_call.1} parent=1 // pred_region
      %27 = vsyncadd [#allocation6], 0
      %s29 = sshll.u32 %s2, 4
      %s30 = int_to_ptr.hbm [resolvable:$true] %s29
      %s31 = sshll.u32 [#allocation5], 4
      %s32 = int_to_ptr.vmem [resolvable:$true] %s31
      %34 = dma.hbm_to_vmem [thread:$0]  %s30, 256, %s32, [#allocation6]
    $region13: #{tpu_custom_call.1} parent=1 // pred_fallthru
      _
    // Predicated region
    $region14: #{tpu_custom_call.1} parent=1 // pred_check
      _
    $region15: #{tpu_custom_call.1} parent=1 // pred_check_branch
      %36 = sbr.rel (0) target = $region17
    $region16: #{tpu_custom_call.1} parent=1 // pred_region
      %38 = dma.done [#allocation3], 256
    $region17: #{tpu_custom_call.1} parent=1 // pred_fallthru
      _
    // Predicated region
    $region18: #{tpu_custom_call.1} parent=1 // pred_check
      _
    $region19: #{tpu_custom_call.1} parent=1 // pred_check_branch
      %40 = sbr.rel (0) target = $region21
    $region20: #{tpu_custom_call.1} parent=1 // pred_region
      %42 = dma.done [#allocation6], 256
    $region21: #{tpu_custom_call.1} parent=1 // pred_fallthru
      _
    %v43 = vld [vmem:[#allocation2] sm:$0xff]
    %v44 = vld [vmem:[#allocation2 + $0x8] sm:$0xff]
    %v45 = vld [vmem:[%s0] sm:$0x3]
    %47 = vset.pattern.permute.xlu0 0
    %48 = vperm.xlu0 %47, %v45
    %v49 = vpop.permute.xlu0 %48
    %53 = vst [vmem:[#allocation1] ss:$4 sm:$0xff] %v43
    %s54 = scalar_lea.vmem [#allocation1], 32
    %55 = vst [vmem:[%s54] ss:$4 sm:$0xff] %v44
    %v56 = vld.sshfl [vmem:[#allocation1] sm:$0xff pattern:$0x73625140]
    %v57 = vld.sshfl [vmem:[#allocation1 + $0x8] sm:$0xff pattern:$0x73625140]
    %v58 = vld.sshfl [vmem:[#allocation1 + $0x10] sm:$0xff pattern:$0x73625140]
    %v59 = vld.sshfl [vmem:[#allocation1 + $0x18] sm:$0xff pattern:$0x73625140]
    %v60 = vld.sshfl [vmem:[#allocation1 + $0x20] sm:$0xff pattern:$0x73625140]
    %v61 = vld.sshfl [vmem:[#allocation1 + $0x28] sm:$0xff pattern:$0x73625140]
    %v62 = vld.sshfl [vmem:[#allocation1 + $0x30] sm:$0xff pattern:$0x73625140]
    %v63 = vld.sshfl [vmem:[#allocation1 + $0x38] sm:$0xff pattern:$0x73625140]
    %v72 = vmul.f32 %v49, %v56
    %v73 = vmul.f32 %v49, %v57
    %v74 = vmul.f32 %v49, %v58
    %v75 = vmul.f32 %v49, %v59
    %v76 = vmul.f32 %v49, %v60
    %v77 = vmul.f32 %v49, %v61
    %v78 = vmul.f32 %v49, %v62
    %v79 = vmul.f32 %v49, %v63
    %v80 = vadd.f32 %v72, 0.500001
    %v81 = vadd.f32 %v73, 0.500001
    %v82 = vadd.f32 %v74, 0.500001
    %v83 = vadd.f32 %v75, 0.500001
    %v84 = vadd.f32 %v76, 0.500001
    %v85 = vadd.f32 %v77, 0.500001
    %v86 = vadd.f32 %v78, 0.500001
    %v87 = vadd.f32 %v79, 0.500001
    %v88 = vrcp.pop %v80
    %v89 = vmul.f32 %v80, %v88
    %v90 = vsub.f32 1.0, %v89
    %v91 = vmul.f32 %v88, %v90
    %v92 = vadd.f32 %v88, %v91
    %vm93 = vweird.f32 %v80
    %vm94 = vweird.f32 %v88
    %vm95 = vmor %vm93, %vm94
    %v96 = vsel %vm95, %v88, %v92
    %v97 = vand.u32 2147483647, %v80
    %vm98 = vcmp.eq.f32.partialorder %v97, 8.507059e+37
    %v99 = vand.u32 %v80, 2147483648
    %v100 = vor.u32 1.1754944e-38, %v99
    %v101 = vsel %vm98, %v100, %v96
    %v102 = vmul.f32 0.5, %v101
    %v103 = vrcp.pop %v81
    %v104 = vmul.f32 %v81, %v103
    %v105 = vsub.f32 1.0, %v104
    %v106 = vmul.f32 %v103, %v105
    %v107 = vadd.f32 %v103, %v106
    %vm108 = vweird.f32 %v81
    %vm109 = vweird.f32 %v103
    %vm110 = vmor %vm108, %vm109
    %v111 = vsel %vm110, %v103, %v107
    %v112 = vand.u32 2147483647, %v81
    %vm113 = vcmp.eq.f32.partialorder %v112, 8.507059e+37
    %v114 = vand.u32 %v81, 2147483648
    %v115 = vor.u32 1.1754944e-38, %v114
    %v116 = vsel %vm113, %v115, %v111
    %v117 = vmul.f32 0.5, %v116
    %v118 = vrcp.pop %v82
    %v119 = vmul.f32 %v82, %v118
    %v120 = vsub.f32 1.0, %v119
    %v121 = vmul.f32 %v118, %v120
    %v122 = vadd.f32 %v118, %v121
    %vm123 = vweird.f32 %v82
    %vm124 = vweird.f32 %v118
    %vm125 = vmor %vm123, %vm124
    %v126 = vsel %vm125, %v118, %v122
    %v127 = vand.u32 2147483647, %v82
    %vm128 = vcmp.eq.f32.partialorder %v127, 8.507059e+37
    %v129 = vand.u32 %v82, 2147483648
    %v130 = vor.u32 1.1754944e-38, %v129
    %v131 = vsel %vm128, %v130, %v126
    %v132 = vmul.f32 0.5, %v131
    %v133 = vrcp.pop %v83
    %v134 = vmul.f32 %v83, %v133
    %v135 = vsub.f32 1.0, %v134
    %v136 = vmul.f32 %v133, %v135
    %v137 = vadd.f32 %v133, %v136
    %vm138 = vweird.f32 %v83
    %vm139 = vweird.f32 %v133
    %vm140 = vmor %vm138, %vm139
    %v141 = vsel %vm140, %v133, %v137
    %v142 = vand.u32 2147483647, %v83
    %vm143 = vcmp.eq.f32.partialorder %v142, 8.507059e+37
    %v144 = vand.u32 %v83, 2147483648
    %v145 = vor.u32 1.1754944e-38, %v144
    %v146 = vsel %vm143, %v145, %v141
    %v147 = vmul.f32 0.5, %v146
    %v148 = vrcp.pop %v84
    %v149 = vmul.f32 %v84, %v148
    %v150 = vsub.f32 1.0, %v149
    %v151 = vmul.f32 %v148, %v150
    %v152 = vadd.f32 %v148, %v151
    %vm153 = vweird.f32 %v84
    %vm154 = vweird.f32 %v148
    %vm155 = vmor %vm153, %vm154
    %v156 = vsel %vm155, %v148, %v152
    %v157 = vand.u32 2147483647, %v84
    %vm158 = vcmp.eq.f32.partialorder %v157, 8.507059e+37
    %v159 = vand.u32 %v84, 2147483648
    %v160 = vor.u32 1.1754944e-38, %v159
    %v161 = vsel %vm158, %v160, %v156
    %v162 = vmul.f32 0.5, %v161
    %v163 = vrcp.pop %v85
    %v164 = vmul.f32 %v85, %v163
    %v165 = vsub.f32 1.0, %v164
    %v166 = vmul.f32 %v163, %v165
    %v167 = vadd.f32 %v163, %v166
    %vm168 = vweird.f32 %v85
    %vm169 = vweird.f32 %v163
    %vm170 = vmor %vm168, %vm169
    %v171 = vsel %vm170, %v163, %v167
    %v172 = vand.u32 2147483647, %v85
    %vm173 = vcmp.eq.f32.partialorder %v172, 8.507059e+37
    %v174 = vand.u32 %v85, 2147483648
    %v175 = vor.u32 1.1754944e-38, %v174
    %v176 = vsel %vm173, %v175, %v171
    %v177 = vmul.f32 0.5, %v176
    %v178 = vrcp.pop %v86
    %v179 = vmul.f32 %v86, %v178
    %v180 = vsub.f32 1.0, %v179
    %v181 = vmul.f32 %v178, %v180
    %v182 = vadd.f32 %v178, %v181
    %vm183 = vweird.f32 %v86
    %vm184 = vweird.f32 %v178
    %vm185 = vmor %vm183, %vm184
    %v186 = vsel %vm185, %v178, %v182
    %v187 = vand.u32 2147483647, %v86
    %vm188 = vcmp.eq.f32.partialorder %v187, 8.507059e+37
    %v189 = vand.u32 %v86, 2147483648
    %v190 = vor.u32 1.1754944e-38, %v189
    %v191 = vsel %vm188, %v190, %v186
    %v192 = vmul.f32 0.5, %v191
    %v193 = vrcp.pop %v87
    %v194 = vmul.f32 %v87, %v193
    %v195 = vsub.f32 1.0, %v194
    %v196 = vmul.f32 %v193, %v195
    %v197 = vadd.f32 %v193, %v196
    %vm198 = vweird.f32 %v87
    %vm199 = vweird.f32 %v193
    %vm200 = vmor %vm198, %vm199
    %v201 = vsel %vm200, %v193, %v197
    %v202 = vand.u32 2147483647, %v87
    %vm203 = vcmp.eq.f32.partialorder %v202, 8.507059e+37
    %v204 = vand.u32 %v87, 2147483648
    %v205 = vor.u32 1.1754944e-38, %v204
    %v206 = vsel %vm203, %v205, %v201
    %v207 = vmul.f32 0.5, %v206
    %v208 = vmul.f32 %v80, 2.0
    %v209 = vmul.f32 %v81, 2.0
    %v210 = vmul.f32 %v82, 2.0
    %v211 = vmul.f32 %v83, 2.0
    %v212 = vmul.f32 %v84, 2.0
    %v213 = vmul.f32 %v85, 2.0
    %v214 = vmul.f32 %v86, 2.0
    %v215 = vmul.f32 %v87, 2.0
    %v216 = vmin.f32 %v208, 1000000.0
    %v217 = vmin.f32 %v209, 1000000.0
    %v218 = vmin.f32 %v210, 1000000.0
    %v219 = vmin.f32 %v211, 1000000.0
    %v220 = vmin.f32 %v212, 1000000.0
    %v221 = vmin.f32 %v213, 1000000.0
    %v222 = vmin.f32 %v214, 1000000.0
    %v223 = vmin.f32 %v215, 1000000.0
    %v224 = vld [vmem:[#allocation5] sm:$0xff]
    %v225 = vld [vmem:[#allocation5 + $0x8] sm:$0xff]
    %v234 = vrot.slane %v117, 6
    %v235 = vrot.slane %v132, 4
    %v236 = vrot.slane %v147, 2
    %v237 = vrot.slane %v177, 6
    %v238 = vrot.slane %v192, 4
    %v239 = vrot.slane %v207, 2
    %vm240 = vcmask 1041408
    %v241 = vsel %vm240, %v102, %v234
    %vm242 = vcmask 1045508
    %v243 = vsel %vm242, %v235, %v236
    %vm244 = vcmask 1043456
    %v245 = vsel %vm244, %v241, %v243
    %v246 = vsel %vm240, %v162, %v237
    %v247 = vsel %vm242, %v238, %v239
    %v248 = vsel %vm244, %v246, %v247
    %vm251 = vcmp.lt.f32.partialorder %v224, %v245
    %vm252 = vcmp.lt.f32.partialorder %v225, %v248
    %v261 = vrot.slane %v217, 6
    %v262 = vrot.slane %v218, 4
    %v263 = vrot.slane %v219, 2
    %v264 = vrot.slane %v221, 6
    %v265 = vrot.slane %v222, 4
    %v266 = vrot.slane %v223, 2
    %v267 = vsel %vm240, %v216, %v261
    %v268 = vsel %vm242, %v262, %v263
    %v269 = vsel %vm244, %v267, %v268
    %v270 = vsel %vm240, %v220, %v264
    %v271 = vsel %vm242, %v265, %v266
    %v272 = vsel %vm244, %v270, %v271
    %v275 = vmul.f32 %v43, %v269
    %v276 = vmul.f32 %v44, %v272
    %v277 = vsel %vm251, %v275, 0.0
    %v278 = vsel %vm252, %v276, 0.0
    %279 = vst [vmem:[#allocation7] sm:$0xff] %v277
    %280 = vst [vmem:[#allocation7 + $0x8] sm:$0xff] %v278
    // Predicated region
    $region22: #{tpu_custom_call.1} parent=1 // pred_check
      _
    $region23: #{tpu_custom_call.1} parent=1 // pred_check_branch
      %282 = sbr.rel (0) target = $region25
    $region24: #{tpu_custom_call.1} parent=1 // pred_region
      %284 = vsyncadd [#allocation4], 0
      %s286 = sshll.u32 [#allocation7], 4
      %s287 = int_to_ptr.vmem [resolvable:$true] %s286
      %s288 = sshll.u32 %s3, 4
      %s289 = int_to_ptr.hbm [resolvable:$true] %s288
      %291 = dma.vmem_to_hbm [thread:$0]  %s287, 256, %s289, [#allocation4]
    $region25: #{tpu_custom_call.1} parent=1 // pred_fallthru
      _
    // Predicated region
    $region26: #{tpu_custom_call.1} parent=1 // pred_check
      _
    $region27: #{tpu_custom_call.1} parent=1 // pred_check_branch
      %293 = sbr.rel (0) target = $region29
    $region28: #{tpu_custom_call.1} parent=1 // pred_region
      %295 = dma.done [#allocation4], 256
    $region29: #{tpu_custom_call.1} parent=1 // pred_fallthru
      _
    %296 = vsyncpa [#allocation3], 1
    %297 = vsyncpa [#allocation6], 1
    %298 = vsyncpa [#allocation4], 1

</llo_original>
